<compile_context>
chip_gen: v6e
topology: v6e:2x2x1
jax: 0.10.0
libtpu: 0.0.40
codegen_flags: <defaults>
</compile_context>

<pallas_src>
import functools
import math

import jax
import jax.numpy as jnp
from jax.experimental import pallas as pl
from jax.experimental.pallas import tpu as pltpu


def _gelu_exact(x):
    # torch.nn.GELU() default = exact erf formulation
    return 0.5 * x * (1.0 + jax.lax.erf(x / math.sqrt(2.0)))


def _vmem_physical_bytes():
    """Per-TensorCore physical VMEM (v5e/v6e: 128 MiB, v7x: 64 MiB)."""
    try:
        return int(pltpu.get_tpu_info().vmem_capacity_bytes)
    except Exception:
        return 64 << 20  # conservative fallback (v7x per-core VMEM)


def _choose_tokens_per_tile(num_tokens, cad, hidden, B, stream_budget_bytes):
    """Largest divisor k of num_tokens whose double-buffered streamed blocks
    (w2 bf16 + b2 f32 + output f32) plus ~2 f32 temps of width k*cad fit
    `stream_budget_bytes`, restricted to lane-dense tiles
    ((k*cad) % 128 == 0, or the full extent k == num_tokens)."""
    per_lane = 2 * (hidden * 2 + 4 + B * 4) + 2 * B * 4
    best = None
    for k in range(1, num_tokens + 1):
        if num_tokens % k:
            continue
        tile_n = k * cad
        if (tile_n % 128) and k != num_tokens:
            continue
        if tile_n * per_lane <= stream_budget_bytes:
            best = k
    if best is not None:
        return best
    # Budget too small for even one token tile: fall back to the smallest
    # legal tile (still correct; pipeline simply takes more steps).
    for k in range(1, num_tokens + 1):
        if num_tokens % k == 0 and ((k * cad) % 128 == 0 or k == num_tokens):
            return k
    return num_tokens


def _mlp_id_proj_kernel(x_ref, w1_ref, b1_ref, w2_ref, b2_ref,
                        gamma_ref, beta_ref, o_ref,
                        *, tokens_per_tile, cad, eps):
    """One grid step = one tile of `tokens_per_tile` output tokens.

    x_ref:   (B, id_dim)        f32   (resident, constant index map)
    w1_ref:  (id_dim, hidden)   bf16  (resident)
    b1_ref:  (1, hidden)        f32   (resident)
    w2_ref:  (hidden, k*cad)    bf16  (streamed per tile, double-buffered)
    b2_ref:  (1, k*cad)         f32   (streamed per tile)
    gamma/beta: (1, cad)        f32   (resident)
    o_ref:   (B, k*cad)         f32   (flat lane-dense output tile)
    """
    # ---- Linear 1 + GELU: recomputed per step (cheap vs the w2 DMA) so the
    # grid axis carries no cross-step dependency and can be 'parallel'.
    xb = x_ref[...].astype(jnp.bfloat16)
    h = jnp.dot(xb, w1_ref[...], preferred_element_type=jnp.float32)
    h = _gelu_exact(h + b1_ref[...])
    h = h.astype(jnp.bfloat16)

    # ---- Linear 2 for this token tile (bf16 MXU, f32 accumulate) ---------
    y = jnp.dot(h, w2_ref[...], preferred_element_type=jnp.float32)
    y = y + b2_ref[...]                           # (B, k*cad) f32

    gamma = gamma_ref[...]                        # (1, cad)
    beta = beta_ref[...]
    inv_cad = 1.0 / cad

    # ---- per-token LayerNorm over cad (lane-aligned slices, no relayout) -
    # One-pass form: var = E[y^2] - mean^2 (both reductions off the raw slice).
    for j in range(tokens_per_tile):              # static unroll, k is small
        yj = y[:, j * cad:(j + 1) * cad]          # (B, cad)
        s1 = jnp.sum(yj, axis=-1, keepdims=True)
        s2 = jnp.sum(yj * yj, axis=-1, keepdims=True)
        mean = s1 * inv_cad
        var = s2 * inv_cad - mean * mean
        yn = (yj - mean) * jax.lax.rsqrt(var + eps)
        o_ref[:, j * cad:(j + 1) * cad] = (yn * gamma + beta).astype(o_ref.dtype)


def mlp_id_projection(id_embeds, params, *, num_tokens, cross_attention_dim,
                      eps=1e-5, vmem_budget_bytes=None):
    """id_embeds: (B, id_dim) f32 -> (B, num_tokens, cross_attention_dim) f32."""
    B, id_dim = id_embeds.shape
    cad = cross_attention_dim
    hidden = params["w1"].shape[1]
    N = cad * num_tokens
    assert params["w2"].shape == (hidden, N)

    # Params are expected to be stored bf16 (matmul weights) at load time so
    # no per-call cast of the dominant HBM tensor happens.  The dtype check is
    # Python-level: no XLA op is emitted on the common path.
    w1 = params["w1"]
    w2 = params["w2"]
    if w1.dtype != jnp.bfloat16:
        w1 = w1.astype(jnp.bfloat16)
    if w2.dtype != jnp.bfloat16:
        w2 = w2.astype(jnp.bfloat16)
    b1 = params["b1"].astype(jnp.float32)
    b2 = params["b2"].astype(jnp.float32)
    gamma = params["gamma"].astype(jnp.float32)
    beta = params["beta"].astype(jnp.float32)

    # ---- per-generation VMEM budget and tile size -------------------------
    physical = _vmem_physical_bytes()
    if vmem_budget_bytes is None:
        # ~60% of physical: ~38 MiB on v7x (64 MiB/TC), ~77 MiB on v5e/v6e.
        vmem_budget_bytes = int(physical * 0.6)
    # Resident (constant-index) inputs are double-buffered by the pipeliner.
    resident_bytes = 2 * (B * id_dim * 4 + id_dim * hidden * 2 + hidden * 4
                          + 2 * cad * 4)
    headroom = 2 << 20  # h / misc f32 temps + compiler-internal scratch
    stream_budget = max(0, vmem_budget_bytes - resident_bytes - headroom)

    k = _choose_tokens_per_tile(num_tokens, cad, hidden, B, stream_budget)
    num_tiles = num_tokens // k
    tile_n = k * cad

    vmem_limit_bytes = int(min(physical,
                               max(vmem_budget_bytes + (8 << 20), 32 << 20)))

    kernel = functools.partial(_mlp_id_proj_kernel,
                               tokens_per_tile=k, cad=cad, eps=eps)

    flops = 2 * B * id_dim * hidden * num_tiles + 2 * B * hidden * N
    bytes_accessed = (id_embeds.size * 4 + w1.size * 2 + b1.size * 4 +
                      w2.size * 2 + b2.size * 4 + (gamma.size + beta.size) * 4 +
                      B * N * 4)

    out_flat = pl.pallas_call(
        kernel,
        out_shape=jax.ShapeDtypeStruct((B, N), jnp.float32),
        grid_spec=pltpu.PrefetchScalarGridSpec(
            num_scalar_prefetch=0,
            grid=(num_tiles,),
            in_specs=[
                pl.BlockSpec((B, id_dim), lambda t: (0, 0)),       # x (resident)
                pl.BlockSpec((id_dim, hidden), lambda t: (0, 0)),  # w1 (resident)
                pl.BlockSpec((1, hidden), lambda t: (0, 0)),       # b1 (resident)
                pl.BlockSpec((hidden, tile_n), lambda t: (0, t)),  # w2 (streamed)
                pl.BlockSpec((1, tile_n), lambda t: (0, t)),       # b2 (streamed)
                pl.BlockSpec((1, cad), lambda t: (0, 0)),          # gamma
                pl.BlockSpec((1, cad), lambda t: (0, 0)),          # beta
            ],
            out_specs=pl.BlockSpec((B, tile_n), lambda t: (0, t)), # flat output
        ),
        compiler_params=pltpu.CompilerParams(
            # No cross-step dependency (h recomputed per step), so the axis is
            # safe to shard across v7x's two TensorCores.
            dimension_semantics=("parallel",),
            vmem_limit_bytes=vmem_limit_bytes),
        cost_estimate=pl.CostEstimate(flops=flops,
                                      transcendentals=B * hidden * num_tiles,
                                      bytes_accessed=bytes_accessed),
    )(id_embeds, w1, b1, w2, b2, gamma, beta)

    # Free contiguous reshape (no transpose, no extra HBM round trip).
    return out_flat.reshape(B, num_tokens, cad)


def init_params(key, id_embeddings_dim, cross_attention_dim, num_tokens):
    hidden = id_embeddings_dim * 2
    out_dim = cross_attention_dim * num_tokens
    k1, k2, k3, k4 = jax.random.split(key, 4)
    # Weights stored as (in, out); matmul weights cast to bf16 ONCE at load
    # time (kernel precision contract); biases kept 2D (1, out) for TPU layout.
    return {
        "w1": (jax.random.normal(k1, (id_embeddings_dim, hidden), jnp.float32)
               * 0.02).astype(jnp.bfloat16),
        "b1": jax.random.normal(k2, (1, hidden), jnp.float32) * 0.02,
        "w2": (jax.random.normal(k3, (hidden, out_dim), jnp.float32)
               * 0.02).astype(jnp.bfloat16),
        "b2": jax.random.normal(k4, (1, out_dim), jnp.float32) * 0.02,
        "gamma": jnp.ones((1, cross_attention_dim), jnp.float32),
        "beta": jnp.zeros((1, cross_attention_dim), jnp.float32),
    }


def reference(id_embeds, params, *, num_tokens, cross_attention_dim, eps=1e-5):
    """Pure-JAX reference matching the kernel's bf16 weight/activation
    quantization (f32 accumulation), otherwise identical to PyTorch math."""
    f32 = jnp.float32
    hi = jax.lax.Precision.HIGHEST
    x = id_embeds.astype(jnp.bfloat16).astype(f32)
    w1 = params["w1"].astype(f32)
    w2 = params["w2"].astype(f32)
    h = jnp.dot(x, w1, precision=hi) + params["b1"].astype(f32)
    h = _gelu_exact(h)
    h = h.astype(jnp.bfloat16).astype(f32)
    y = jnp.dot(h, w2, precision=hi) + params["b2"].astype(f32)
    y = y.reshape(-1, num_tokens, cross_attention_dim)
    mean = y.mean(-1, keepdims=True)
    var = ((y - mean) ** 2).mean(-1, keepdims=True)
    y = (y - mean) * jax.lax.rsqrt(var + eps)
    return y * params["gamma"][0] + params["beta"][0]


if __name__ == "__main__":
    # Small shapes consistent with the module structure; cad % 128 == 0 so
    # every token slice / output store is lane-dense and unmasked.
    batch = 8
    id_embeddings_dim = 128      # hidden = 256
    cross_attention_dim = 256
    num_tokens = 4               # N = 1024

    key = jax.random.PRNGKey(0)
    kp, kx = jax.random.split(key)
    params = init_params(kp, id_embeddings_dim, cross_attention_dim, num_tokens)
    id_embeds = jax.random.normal(kx, (batch, id_embeddings_dim), jnp.float32)

    ref = reference(id_embeds, params,
                    num_tokens=num_tokens,
                    cross_attention_dim=cross_attention_dim)

    # 1) Default budget: the tile chooser picks the largest tile that fits
    #    (for these tiny shapes that is the full N in one grid step).
    out = mlp_id_projection(id_embeds, params,
                            num_tokens=num_tokens,
                            cross_attention_dim=cross_attention_dim)
    out = jax.block_until_ready(out)
    assert out.shape == (batch, num_tokens, cross_attention_dim), out.shape
    err = float(jnp.max(jnp.abs(out - ref)))
    assert err < 1e-2, err

    # 2) Artificially tiny VMEM budget: forces the multi-tile w2-streaming
    #    path (4 grid steps of one token each) — exercises the pipeline.
    out_stream = mlp_id_projection(id_embeds, params,
                                   num_tokens=num_tokens,
                                   cross_attention_dim=cross_attention_dim,
                                   vmem_budget_bytes=1 << 20)
    out_stream = jax.block_until_ready(out_stream)
    err2 = float(jnp.max(jnp.abs(out_stream - ref)))
    assert err2 < 1e-2, err2

    print("KERNEL_OK")
</pallas_src>

<mosaic_0001>
module attributes {stable_mosaic.version = 11 : i64} {
  func.func @_mlp_id_proj_kernel(%arg0: i32, %arg1: memref<8x128xf32, #tpu.memory_space<vmem>>, %arg2: memref<128x256xbf16, #tpu.memory_space<vmem>>, %arg3: memref<1x256xf32, #tpu.memory_space<vmem>>, %arg4: memref<256x1024xbf16, #tpu.memory_space<vmem>>, %arg5: memref<1x1024xf32, #tpu.memory_space<vmem>>, %arg6: memref<1x256xf32, #tpu.memory_space<vmem>>, %arg7: memref<1x256xf32, #tpu.memory_space<vmem>>, %arg8: memref<8x1024xf32, #tpu.memory_space<vmem>>) attributes {dimension_semantics = [#tpu.dimension_semantics<parallel>], iteration_bounds = array<i64: 1>, scalar_prefetch = 0 : i64, scratch_operands = 0 : i64, tpu.core_type = #tpu.core_type<tc>, window_params = [{pipeline_mode = #tpu.pipeline_mode<synchronous>, transform_indices = @transform_0, window_bounds = array<i64: 8, 128>}, {pipeline_mode = #tpu.pipeline_mode<synchronous>, transform_indices = @transform_1, window_bounds = array<i64: 128, 256>}, {pipeline_mode = #tpu.pipeline_mode<synchronous>, transform_indices = @transform_2, window_bounds = array<i64: 1, 256>}, {transform_indices = @transform_3, window_bounds = array<i64: 256, 1024>}, {transform_indices = @transform_4, window_bounds = array<i64: 1, 1024>}, {pipeline_mode = #tpu.pipeline_mode<synchronous>, transform_indices = @transform_5, window_bounds = array<i64: 1, 256>}, {pipeline_mode = #tpu.pipeline_mode<synchronous>, transform_indices = @transform_6, window_bounds = array<i64: 1, 256>}, {transform_indices = @transform_7, window_bounds = array<i64: 8, 1024>}]} {
    %c0 = arith.constant 0 : index
    %c0_0 = arith.constant 0 : index
    %0 = vector.load %arg1[%c0, %c0_0] : memref<8x128xf32, #tpu.memory_space<vmem>>, vector<8x128xf32>
    %1 = arith.truncf %0 : vector<8x128xf32> to vector<8x128xbf16>
    %c0_1 = arith.constant 0 : index
    %c0_2 = arith.constant 0 : index
    %2 = vector.load %arg2[%c0_1, %c0_2] : memref<128x256xbf16, #tpu.memory_space<vmem>>, vector<128x256xbf16>
    %cst = arith.constant dense<0.000000e+00> : vector<8x256xf32>
    %3 = tpu.matmul %1, %2, %cst {dimension_numbers = #tpu.dot_dimension_numbers<[1], [0], [0], [1], [0, 0, 1, 1], [], []>} : vector<8x128xbf16>, vector<128x256xbf16>, vector<8x256xf32> -> vector<8x256xf32>
    %c0_3 = arith.constant 0 : index
    %c0_4 = arith.constant 0 : index
    %4 = vector.load %arg3[%c0_3, %c0_4] : memref<1x256xf32, #tpu.memory_space<vmem>>, vector<1x256xf32>
    %5 = vector.broadcast %4 : vector<1x256xf32> to vector<8x256xf32>
    %6 = arith.addf %3, %5 : vector<8x256xf32>
    %cst_5 = arith.constant 5.000000e-01 : f32
    %7 = vector.broadcast %cst_5 : f32 to vector<8x256xf32>
    %8 = arith.mulf %7, %6 : vector<8x256xf32>
    %cst_6 = arith.constant 1.41421354 : f32
    %9 = vector.broadcast %cst_6 : f32 to vector<8x256xf32>
    %10 = arith.divf %6, %9 : vector<8x256xf32>
    %11 = math.erf %10 : vector<8x256xf32>
    %cst_7 = arith.constant 1.000000e+00 : f32
    %12 = vector.broadcast %cst_7 : f32 to vector<8x256xf32>
    %13 = arith.addf %12, %11 : vector<8x256xf32>
    %14 = arith.mulf %8, %13 : vector<8x256xf32>
    %15 = arith.truncf %14 : vector<8x256xf32> to vector<8x256xbf16>
    %c0_8 = arith.constant 0 : index
    %c0_9 = arith.constant 0 : index
    %16 = vector.load %arg4[%c0_8, %c0_9] : memref<256x1024xbf16, #tpu.memory_space<vmem>>, vector<256x1024xbf16>
    %cst_10 = arith.constant dense<0.000000e+00> : vector<8x1024xf32>
    %17 = tpu.matmul %15, %16, %cst_10 {dimension_numbers = #tpu.dot_dimension_numbers<[1], [0], [0], [1], [0, 0, 1, 1], [], []>} : vector<8x256xbf16>, vector<256x1024xbf16>, vector<8x1024xf32> -> vector<8x1024xf32>
    %c0_11 = arith.constant 0 : index
    %c0_12 = arith.constant 0 : index
    %18 = vector.load %arg5[%c0_11, %c0_12] : memref<1x1024xf32, #tpu.memory_space<vmem>>, vector<1x1024xf32>
    %19 = vector.broadcast %18 : vector<1x1024xf32> to vector<8x1024xf32>
    %20 = arith.addf %17, %19 : vector<8x1024xf32>
    %c0_13 = arith.constant 0 : index
    %c0_14 = arith.constant 0 : index
    %21 = vector.load %arg6[%c0_13, %c0_14] : memref<1x256xf32, #tpu.memory_space<vmem>>, vector<1x256xf32>
    %c0_15 = arith.constant 0 : index
    %c0_16 = arith.constant 0 : index
    %22 = vector.load %arg7[%c0_15, %c0_16] : memref<1x256xf32, #tpu.memory_space<vmem>>, vector<1x256xf32>
    %23 = vector.extract_strided_slice %20 {offsets = [0, 0], sizes = [8, 256], strides = [1, 1]} : vector<8x1024xf32> to vector<8x256xf32>
    %cst_17 = arith.constant dense<0.000000e+00> : vector<8xf32>
    %24 = vector.multi_reduction <add>, %23, %cst_17 [1] : vector<8x256xf32> to vector<8xf32>
    %25 = vector.shape_cast %24 : vector<8xf32> to vector<8x1xf32>
    %26 = arith.mulf %23, %23 : vector<8x256xf32>
    %cst_18 = arith.constant dense<0.000000e+00> : vector<8xf32>
    %27 = vector.multi_reduction <add>, %26, %cst_18 [1] : vector<8x256xf32> to vector<8xf32>
    %28 = vector.shape_cast %27 : vector<8xf32> to vector<8x1xf32>
    %cst_19 = arith.constant 3.906250e-03 : f32
    %29 = vector.broadcast %cst_19 : f32 to vector<8x1xf32>
    %30 = arith.mulf %25, %29 : vector<8x1xf32>
    %cst_20 = arith.constant 3.906250e-03 : f32
    %31 = vector.broadcast %cst_20 : f32 to vector<8x1xf32>
    %32 = arith.mulf %28, %31 : vector<8x1xf32>
    %33 = arith.mulf %30, %30 : vector<8x1xf32>
    %34 = arith.subf %32, %33 : vector<8x1xf32>
    %35 = vector.broadcast %30 : vector<8x1xf32> to vector<8x256xf32>
    %36 = arith.subf %23, %35 : vector<8x256xf32>
    %cst_21 = arith.constant 9.99999974E-6 : f32
    %37 = vector.broadcast %cst_21 : f32 to vector<8x1xf32>
    %38 = arith.addf %34, %37 : vector<8x1xf32>
    %39 = math.rsqrt %38 : vector<8x1xf32>
    %40 = vector.broadcast %39 : vector<8x1xf32> to vector<8x256xf32>
    %41 = arith.mulf %36, %40 : vector<8x256xf32>
    %42 = vector.broadcast %21 : vector<1x256xf32> to vector<8x256xf32>
    %43 = arith.mulf %41, %42 : vector<8x256xf32>
    %44 = vector.broadcast %22 : vector<1x256xf32> to vector<8x256xf32>
    %45 = arith.addf %43, %44 : vector<8x256xf32>
    %c0_22 = arith.constant 0 : index
    %c0_23 = arith.constant 0 : index
    %46 = vector.load %arg8[%c0_22, %c0_23] : memref<8x1024xf32, #tpu.memory_space<vmem>>, vector<8x256xf32>
    tpu.vector_store %arg8[%c0_22, %c0_23], %45 {strides = array<i32>} : memref<8x1024xf32, #tpu.memory_space<vmem>>, vector<8x256xf32>,
    %47 = vector.extract_strided_slice %20 {offsets = [0, 256], sizes = [8, 256], strides = [1, 1]} : vector<8x1024xf32> to vector<8x256xf32>
    %cst_24 = arith.constant dense<0.000000e+00> : vector<8xf32>
    %48 = vector.multi_reduction <add>, %47, %cst_24 [1] : vector<8x256xf32> to vector<8xf32>
    %49 = vector.shape_cast %48 : vector<8xf32> to vector<8x1xf32>
    %50 = arith.mulf %47, %47 : vector<8x256xf32>
    %cst_25 = arith.constant dense<0.000000e+00> : vector<8xf32>
    %51 = vector.multi_reduction <add>, %50, %cst_25 [1] : vector<8x256xf32> to vector<8xf32>
    %52 = vector.shape_cast %51 : vector<8xf32> to vector<8x1xf32>
    %cst_26 = arith.constant 3.906250e-03 : f32
    %53 = vector.broadcast %cst_26 : f32 to vector<8x1xf32>
    %54 = arith.mulf %49, %53 : vector<8x1xf32>
    %cst_27 = arith.constant 3.906250e-03 : f32
    %55 = vector.broadcast %cst_27 : f32 to vector<8x1xf32>
    %56 = arith.mulf %52, %55 : vector<8x1xf32>
    %57 = arith.mulf %54, %54 : vector<8x1xf32>
    %58 = arith.subf %56, %57 : vector<8x1xf32>
    %59 = vector.broadcast %54 : vector<8x1xf32> to vector<8x256xf32>
    %60 = arith.subf %47, %59 : vector<8x256xf32>
    %cst_28 = arith.constant 9.99999974E-6 : f32
    %61 = vector.broadcast %cst_28 : f32 to vector<8x1xf32>
    %62 = arith.addf %58, %61 : vector<8x1xf32>
    %63 = math.rsqrt %62 : vector<8x1xf32>
    %64 = vector.broadcast %63 : vector<8x1xf32> to vector<8x256xf32>
    %65 = arith.mulf %60, %64 : vector<8x256xf32>
    %66 = vector.broadcast %21 : vector<1x256xf32> to vector<8x256xf32>
    %67 = arith.mulf %65, %66 : vector<8x256xf32>
    %68 = vector.broadcast %22 : vector<1x256xf32> to vector<8x256xf32>
    %69 = arith.addf %67, %68 : vector<8x256xf32>
    %c0_29 = arith.constant 0 : index
    %c256 = arith.constant 256 : index
    %70 = vector.load %arg8[%c0_29, %c256] : memref<8x1024xf32, #tpu.memory_space<vmem>>, vector<8x256xf32>
    tpu.vector_store %arg8[%c0_29, %c256], %69 {strides = array<i32>} : memref<8x1024xf32, #tpu.memory_space<vmem>>, vector<8x256xf32>,
    %71 = vector.extract_strided_slice %20 {offsets = [0, 512], sizes = [8, 256], strides = [1, 1]} : vector<8x1024xf32> to vector<8x256xf32>
    %cst_30 = arith.constant dense<0.000000e+00> : vector<8xf32>
    %72 = vector.multi_reduction <add>, %71, %cst_30 [1] : vector<8x256xf32> to vector<8xf32>
    %73 = vector.shape_cast %72 : vector<8xf32> to vector<8x1xf32>
    %74 = arith.mulf %71, %71 : vector<8x256xf32>
    %cst_31 = arith.constant dense<0.000000e+00> : vector<8xf32>
    %75 = vector.multi_reduction <add>, %74, %cst_31 [1] : vector<8x256xf32> to vector<8xf32>
    %76 = vector.shape_cast %75 : vector<8xf32> to vector<8x1xf32>
    %cst_32 = arith.constant 3.906250e-03 : f32
    %77 = vector.broadcast %cst_32 : f32 to vector<8x1xf32>
    %78 = arith.mulf %73, %77 : vector<8x1xf32>
    %cst_33 = arith.constant 3.906250e-03 : f32
    %79 = vector.broadcast %cst_33 : f32 to vector<8x1xf32>
    %80 = arith.mulf %76, %79 : vector<8x1xf32>
    %81 = arith.mulf %78, %78 : vector<8x1xf32>
    %82 = arith.subf %80, %81 : vector<8x1xf32>
    %83 = vector.broadcast %78 : vector<8x1xf32> to vector<8x256xf32>
    %84 = arith.subf %71, %83 : vector<8x256xf32>
    %cst_34 = arith.constant 9.99999974E-6 : f32
    %85 = vector.broadcast %cst_34 : f32 to vector<8x1xf32>
    %86 = arith.addf %82, %85 : vector<8x1xf32>
    %87 = math.rsqrt %86 : vector<8x1xf32>
    %88 = vector.broadcast %87 : vector<8x1xf32> to vector<8x256xf32>
    %89 = arith.mulf %84, %88 : vector<8x256xf32>
    %90 = vector.broadcast %21 : vector<1x256xf32> to vector<8x256xf32>
    %91 = arith.mulf %89, %90 : vector<8x256xf32>
    %92 = vector.broadcast %22 : vector<1x256xf32> to vector<8x256xf32>
    %93 = arith.addf %91, %92 : vector<8x256xf32>
    %c0_35 = arith.constant 0 : index
    %c512 = arith.constant 512 : index
    %94 = vector.load %arg8[%c0_35, %c512] : memref<8x1024xf32, #tpu.memory_space<vmem>>, vector<8x256xf32>
    tpu.vector_store %arg8[%c0_35, %c512], %93 {strides = array<i32>} : memref<8x1024xf32, #tpu.memory_space<vmem>>, vector<8x256xf32>,
    %95 = vector.extract_strided_slice %20 {offsets = [0, 768], sizes = [8, 256], strides = [1, 1]} : vector<8x1024xf32> to vector<8x256xf32>
    %cst_36 = arith.constant dense<0.000000e+00> : vector<8xf32>
    %96 = vector.multi_reduction <add>, %95, %cst_36 [1] : vector<8x256xf32> to vector<8xf32>
    %97 = vector.shape_cast %96 : vector<8xf32> to vector<8x1xf32>
    %98 = arith.mulf %95, %95 : vector<8x256xf32>
    %cst_37 = arith.constant dense<0.000000e+00> : vector<8xf32>
    %99 = vector.multi_reduction <add>, %98, %cst_37 [1] : vector<8x256xf32> to vector<8xf32>
    %100 = vector.shape_cast %99 : vector<8xf32> to vector<8x1xf32>
    %cst_38 = arith.constant 3.906250e-03 : f32
    %101 = vector.broadcast %cst_38 : f32 to vector<8x1xf32>
    %102 = arith.mulf %97, %101 : vector<8x1xf32>
    %cst_39 = arith.constant 3.906250e-03 : f32
    %103 = vector.broadcast %cst_39 : f32 to vector<8x1xf32>
    %104 = arith.mulf %100, %103 : vector<8x1xf32>
    %105 = arith.mulf %102, %102 : vector<8x1xf32>
    %106 = arith.subf %104, %105 : vector<8x1xf32>
    %107 = vector.broadcast %102 : vector<8x1xf32> to vector<8x256xf32>
    %108 = arith.subf %95, %107 : vector<8x256xf32>
    %cst_40 = arith.constant 9.99999974E-6 : f32
    %109 = vector.broadcast %cst_40 : f32 to vector<8x1xf32>
    %110 = arith.addf %106, %109 : vector<8x1xf32>
    %111 = math.rsqrt %110 : vector<8x1xf32>
    %112 = vector.broadcast %111 : vector<8x1xf32> to vector<8x256xf32>
    %113 = arith.mulf %108, %112 : vector<8x256xf32>
    %114 = vector.broadcast %21 : vector<1x256xf32> to vector<8x256xf32>
    %115 = arith.mulf %113, %114 : vector<8x256xf32>
    %116 = vector.broadcast %22 : vector<1x256xf32> to vector<8x256xf32>
    %117 = arith.addf %115, %116 : vector<8x256xf32>
    %c0_41 = arith.constant 0 : index
    %c768 = arith.constant 768 : index
    %118 = vector.load %arg8[%c0_41, %c768] : memref<8x1024xf32, #tpu.memory_space<vmem>>, vector<8x256xf32>
    tpu.vector_store %arg8[%c0_41, %c768], %117 {strides = array<i32>} : memref<8x1024xf32, #tpu.memory_space<vmem>>, vector<8x256xf32>,
    return
  }
  func.func @transform_0(%arg0: i32) -> (i32, i32) {
    %c0_i32 = arith.constant 0 : i32
    %c0_i32_0 = arith.constant 0 : i32
    %c0_i32_1 = arith.constant 0 : i32
    return %c0_i32, %c0_i32_0 : i32, i32
  }
  func.func @transform_1(%arg0: i32) -> (i32, i32) {
    %c0_i32 = arith.constant 0 : i32
    %c0_i32_0 = arith.constant 0 : i32
    %c0_i32_1 = arith.constant 0 : i32
    return %c0_i32, %c0_i32_0 : i32, i32
  }
  func.func @transform_2(%arg0: i32) -> (i32, i32) {
    %c0_i32 = arith.constant 0 : i32
    %c0_i32_0 = arith.constant 0 : i32
    %c0_i32_1 = arith.constant 0 : i32
    return %c0_i32, %c0_i32_0 : i32, i32
  }
  func.func @transform_3(%arg0: i32) -> (i32, i32) {
    %c0_i32 = arith.constant 0 : i32
    %c0_i32_0 = arith.constant 0 : i32
    return %c0_i32, %arg0 : i32, i32
  }
  func.func @transform_4(%arg0: i32) -> (i32, i32) {
    %c0_i32 = arith.constant 0 : i32
    %c0_i32_0 = arith.constant 0 : i32
    return %c0_i32, %arg0 : i32, i32
  }
  func.func @transform_5(%arg0: i32) -> (i32, i32) {
    %c0_i32 = arith.constant 0 : i32
    %c0_i32_0 = arith.constant 0 : i32
    %c0_i32_1 = arith.constant 0 : i32
    return %c0_i32, %c0_i32_0 : i32, i32
  }
  func.func @transform_6(%arg0: i32) -> (i32, i32) {
    %c0_i32 = arith.constant 0 : i32
    %c0_i32_0 = arith.constant 0 : i32
    %c0_i32_1 = arith.constant 0 : i32
    return %c0_i32, %c0_i32_0 : i32, i32
  }
  func.func @transform_7(%arg0: i32) -> (i32, i32) {
    %c0_i32 = arith.constant 0 : i32
    %c0_i32_0 = arith.constant 0 : i32
    return %c0_i32, %arg0 : i32, i32
  }
}

</mosaic_0001>

<llo_original>
// kernel: tpu_custom_call.1
$region0: #{tpu_custom_call.1}
  #allocation0 [shape = 'u32[]', space=smem, size = 0x4, offset = 0x4, fixed_abs, tag = 'smem constant byte address 0x4 - core index']
  #allocation1 [shape = 'u32[144,128]{1,0:T(1,128)}', space=vmem, size = 0x12000, scoped, tag = 'internal scratch']
  %s0 = inlined_call_operand.hbm [shape: f32[8,128], index: 0, kind: input, shape index: {}]
  %s1 = inlined_call_operand.hbm [shape: bf16[128,256], index: 1, kind: input, shape index: {}]
  %s2 = inlined_call_operand.vmem [shape: f32[1,256], index: 2, kind: input, shape index: {}]
  %s3 = inlined_call_operand.hbm [shape: bf16[256,1024], index: 3, kind: input, shape index: {}]
  %s4 = inlined_call_operand.hbm [shape: f32[1,1024], index: 4, kind: input, shape index: {}]
  %s5 = inlined_call_operand.vmem [shape: f32[1,256], index: 5, kind: input, shape index: {}]
  %s6 = inlined_call_operand.vmem [shape: f32[1,256], index: 6, kind: input, shape index: {}]
  %s7 = inlined_call_operand.hbm [shape: f32[8,1024], index: 7, kind: output, shape index: {}]
  %s8 = sld [smem:[#allocation0]]
  $region54: #{tpu_custom_call.1} parent=0
    _
  %s10 = ssub.s32 1, %s8
  %s11 = scalar_select 0, %s10, %s8
  $region1: #{tpu_custom_call.1} parent=0
    #allocation2 [shape = 'u8[4096]{0}', space=vmem, size = 0x1000, scoped, tag = 'input window, operand 0, single buffered']
    #allocation3 [shape = 's32[1]{0}', space=sflag, size = 0x4, scoped, tag = 'scoped memory for tpu_custom_call.1']
    #allocation4 [shape = 's32[1]{0}', space=sflag, size = 0x4, scoped, tag = 'scoped memory for tpu_custom_call.1']
    #allocation5 [shape = 'u8[65536]{0}', space=vmem, size = 0x10000, scoped, tag = 'input window, operand 1, single buffered']
    #allocation6 [shape = 's32[1]{0}', space=sflag, size = 0x4, scoped, tag = 'scoped memory for tpu_custom_call.1']
    #allocation7 [shape = 'u8[524288]{0}', space=vmem, size = 0x80000, scoped, tag = 'input window, operand 3, single buffered']
    #allocation8 [shape = 'u8[4096]{0}', space=vmem, size = 0x1000, scoped, tag = 'input window, operand 4, single buffered']
    #allocation9 [shape = 's32[1]{0}', space=sflag, size = 0x4, scoped, tag = 'scoped memory for tpu_custom_call.1']
    #allocation10 [shape = 'u8[32768]{0}', space=vmem, size = 0x8000, scoped, tag = 'output window, operand 0, single buffered']
    %12 = vsyncpa [#allocation3], 0
    %13 = vsyncpa [#allocation6], 0
    %14 = vsyncpa [#allocation9], 0
    %15 = vsyncpa [#allocation4], 0
    // Predicated region
    $region2: #{tpu_custom_call.1} parent=1 // pred_check
      _
    $region3: #{tpu_custom_call.1} parent=1 // pred_check_branch
      %17 = sbr.rel (0) target = $region5
    $region4: #{tpu_custom_call.1} parent=1 // pred_region
      %s19 = ssub.s32 128, 128
      %20 = vsyncadd [#allocation3], %s19
      %s22 = sshll.u32 [#allocation2], 4
      %s23 = int_to_ptr.vmem [resolvable:$true] %s22
      %25 = dma.hbm_to_vmem [thread:$0]  %s0, 128, %s23, [#allocation3]
    $region5: #{tpu_custom_call.1} parent=1 // pred_fallthru
      _
    // Predicated region
    $region6: #{tpu_custom_call.1} parent=1 // pred_check
      _
    $region7: #{tpu_custom_call.1} parent=1 // pred_check_branch
      %27 = sbr.rel (0) target = $region9
    $region8: #{tpu_custom_call.1} parent=1 // pred_region
      %s29 = ssub.s32 2048, 2048
      %30 = vsyncadd [#allocation6], %s29
      %s31 = sshll.u32 [#allocation5], 4
      %s32 = int_to_ptr.vmem [resolvable:$true] %s31
      %37 = dma.hbm_to_vmem [thread:$0]  %s1, 2048, %s32, [#allocation6], 128, 128, 8
    $region9: #{tpu_custom_call.1} parent=1 // pred_fallthru
      _
    // Predicated region
    $region10: #{tpu_custom_call.1} parent=1 // pred_check
      _
    $region11: #{tpu_custom_call.1} parent=1 // pred_check_branch
      %39 = sbr.rel (0) target = $region13
    $region12: #{tpu_custom_call.1} parent=1 // pred_region
      _
    $region13: #{tpu_custom_call.1} parent=1 // pred_fallthru
      _
    // Predicated region
    $region14: #{tpu_custom_call.1} parent=1 // pred_check
      _
    $region15: #{tpu_custom_call.1} parent=1 // pred_check_branch
      %41 = sbr.rel (0) target = $region17
    $region16: #{tpu_custom_call.1} parent=1 // pred_region
      %s43 = ssub.s32 16384, 16384
      %44 = vsyncadd [#allocation6], %s43
      %s45 = sshll.u32 [#allocation7], 4
      %s46 = int_to_ptr.vmem [resolvable:$true] %s45
      %51 = dma.hbm_to_vmem [thread:$0]  %s3, 16384, %s46, [#allocation6], 512, 512, 32
    $region17: #{tpu_custom_call.1} parent=1 // pred_fallthru
      _
    // Predicated region
    $region18: #{tpu_custom_call.1} parent=1 // pred_check
      _
    $region19: #{tpu_custom_call.1} parent=1 // pred_check_branch
      %53 = sbr.rel (0) target = $region21
    $region20: #{tpu_custom_call.1} parent=1 // pred_region
      %s55 = ssub.s32 128, 128
      %56 = vsyncadd [#allocation9], %s55
      %s58 = sshll.u32 [#allocation8], 4
      %s59 = int_to_ptr.vmem [resolvable:$true] %s58
      %61 = dma.hbm_to_vmem [thread:$0]  %s4, 128, %s59, [#allocation9]
    $region21: #{tpu_custom_call.1} parent=1 // pred_fallthru
      _
    // Predicated region
    $region22: #{tpu_custom_call.1} parent=1 // pred_check
      _
    $region23: #{tpu_custom_call.1} parent=1 // pred_check_branch
      %63 = sbr.rel (0) target = $region25
    $region24: #{tpu_custom_call.1} parent=1 // pred_region
      _
    $region25: #{tpu_custom_call.1} parent=1 // pred_fallthru
      _
    // Predicated region
    $region26: #{tpu_custom_call.1} parent=1 // pred_check
      _
    $region27: #{tpu_custom_call.1} parent=1 // pred_check_branch
      %65 = sbr.rel (0) target = $region29
    $region28: #{tpu_custom_call.1} parent=1 // pred_region
      _
    $region29: #{tpu_custom_call.1} parent=1 // pred_fallthru
      _
    // Predicated region
    $region30: #{tpu_custom_call.1} parent=1 // pred_check
      _
    $region31: #{tpu_custom_call.1} parent=1 // pred_check_branch
      %67 = sbr.rel (0) target = $region33
    $region32: #{tpu_custom_call.1} parent=1 // pred_region
      %68 = dma.done [#allocation3], 128
    $region33: #{tpu_custom_call.1} parent=1 // pred_fallthru
      _
    // Predicated region
    $region34: #{tpu_custom_call.1} parent=1 // pred_check
      _
    $region35: #{tpu_custom_call.1} parent=1 // pred_check_branch
      %70 = sbr.rel (0) target = $region37
    $region36: #{tpu_custom_call.1} parent=1 // pred_region
      %71 = dma.done [#allocation6], 2048
    $region37: #{tpu_custom_call.1} parent=1 // pred_fallthru
      _
    // Predicated region
    $region38: #{tpu_custom_call.1} parent=1 // pred_check
      _
    $region39: #{tpu_custom_call.1} parent=1 // pred_check_branch
      %73 = sbr.rel (0) target = $region41
    $region40: #{tpu_custom_call.1} parent=1 // pred_region
      %74 = dma.done [#allocation6], 16384
    $region41: #{tpu_custom_call.1} parent=1 // pred_fallthru
      _
    // Predicated region
    $region42: #{tpu_custom_call.1} parent=1 // pred_check
      _
    $region43: #{tpu_custom_call.1} parent=1 // pred_check_branch
      %76 = sbr.rel (0) target = $region45
    $region44: #{tpu_custom_call.1} parent=1 // pred_region
      %77 = dma.done [#allocation9], 128
    $region45: #{tpu_custom_call.1} parent=1 // pred_fallthru
      _
    %v79 = vld [vmem:[#allocation2] sm:$0xff]
    %v80 = vpack.c.bf16 %v79, %v79
    %v81 = vld [vmem:[#allocation5] sm:$0xff]
    %v82 = vld [vmem:[#allocation5 + $0x8] sm:$0xff]
    %v83 = vld [vmem:[#allocation5 + $0x10] sm:$0xff]
    %v84 = vld [vmem:[#allocation5 + $0x18] sm:$0xff]
    %v85 = vld [vmem:[#allocation5 + $0x20] sm:$0xff]
    %v86 = vld [vmem:[#allocation5 + $0x28] sm:$0xff]
    %v87 = vld [vmem:[#allocation5 + $0x30] sm:$0xff]
    %v88 = vld [vmem:[#allocation5 + $0x38] sm:$0xff]
    %v89 = vld [vmem:[#allocation5 + $0x40] sm:$0xff]
    %v90 = vld [vmem:[#allocation5 + $0x48] sm:$0xff]
    %v91 = vld [vmem:[#allocation5 + $0x50] sm:$0xff]
    %v92 = vld [vmem:[#allocation5 + $0x58] sm:$0xff]
    %v93 = vld [vmem:[#allocation5 + $0x60] sm:$0xff]
    %v94 = vld [vmem:[#allocation5 + $0x68] sm:$0xff]
    %v95 = vld [vmem:[#allocation5 + $0x70] sm:$0xff]
    %v96 = vld [vmem:[#allocation5 + $0x78] sm:$0xff]
    %v97 = vld [vmem:[%s2] sm:$0x3]
    %v99 = vlaneseq
    %v100 = vshrl.u32 %v99, 7
    %v101 = vsub.s32 0, %v100
    %v102 = vrot.slane %v97, %v101
    %v103 = vlaneseq
    %v104 = vshrl.u32 %v103, 7
    %v105 = vsub.s32 1, %v104
    %v106 = vrot.slane %v97, %v105
    %v125 = vunpack.c.l.b16 %v81
    %v126 = vunpack.c.h.b16 %v81
    %v127 = vunpack.c.l.b16 %v82
    %v128 = vunpack.c.h.b16 %v82
    %v129 = vunpack.c.l.b16 %v83
    %v130 = vunpack.c.h.b16 %v83
    %v131 = vunpack.c.l.b16 %v84
    %v132 = vunpack.c.h.b16 %v84
    %v133 = vunpack.c.l.b16 %v85
    %v134 = vunpack.c.h.b16 %v85
    %v135 = vunpack.c.l.b16 %v86
    %v136 = vunpack.c.h.b16 %v86
    %v137 = vunpack.c.l.b16 %v87
    %v138 = vunpack.c.h.b16 %v87
    %v139 = vunpack.c.l.b16 %v88
    %v140 = vunpack.c.h.b16 %v88
    %v141 = vunpack.c.l.b16 %v89
    %v142 = vunpack.c.h.b16 %v89
    %v143 = vunpack.c.l.b16 %v90
    %v144 = vunpack.c.h.b16 %v90
    %v145 = vunpack.c.l.b16 %v91
    %v146 = vunpack.c.h.b16 %v91
    %v147 = vunpack.c.l.b16 %v92
    %v148 = vunpack.c.h.b16 %v92
    %v149 = vunpack.c.l.b16 %v93
    %v150 = vunpack.c.h.b16 %v93
    %v151 = vunpack.c.l.b16 %v94
    %v152 = vunpack.c.h.b16 %v94
    %v153 = vunpack.c.l.b16 %v95
    %v154 = vunpack.c.h.b16 %v95
    %v155 = vunpack.c.l.b16 %v96
    %v156 = vunpack.c.h.b16 %v96
    %v157 = vpack.c.b16 %v127, %v125
    %v158 = vpack.c.b16 %v128, %v126
    %v159 = vpack.c.b16 %v131, %v129
    %v160 = vpack.c.b16 %v132, %v130
    %v161 = vpack.c.b16 %v135, %v133
    %v162 = vpack.c.b16 %v136, %v134
    %v163 = vpack.c.b16 %v139, %v137
    %v164 = vpack.c.b16 %v140, %v138
    %v165 = vpack.c.b16 %v143, %v141
    %v166 = vpack.c.b16 %v144, %v142
    %v167 = vpack.c.b16 %v147, %v145
    %v168 = vpack.c.b16 %v148, %v146
    %v169 = vpack.c.b16 %v151, %v149
    %v170 = vpack.c.b16 %v152, %v150
    %v171 = vpack.c.b16 %v155, %v153
    %v172 = vpack.c.b16 %v156, %v154
    %189 = vmatprep.subr.bf16.mxu0 %v172
    %190 = vmatpush1.bf16.msra.mxu0 %v171
    %191 = vmatprep.subr.bf16.mxu0 %v170
    %192 = vmatpush1.bf16.msra.mxu0 %v169
    %193 = vmatprep.subr.bf16.mxu0 %v168
    %194 = vmatpush1.bf16.msra.mxu0 %v167
    %195 = vmatprep.subr.bf16.mxu0 %v166
    %196 = vmatpush1.bf16.msra.mxu0 %v165
    %197 = vmatprep.subr.bf16.mxu0 %v164
    %198 = vmatpush1.bf16.msra.mxu0 %v163
    %199 = vmatprep.subr.bf16.mxu0 %v162
    %200 = vmatpush1.bf16.msra.mxu0 %v161
    %201 = vmatprep.subr.bf16.mxu0 %v160
    %202 = vmatpush1.bf16.msra.mxu0 %v159
    %203 = vmatprep.subr.bf16.mxu0 %v158
    %204 = vmatpush1.bf16.msra.mxu0 %v157
    %205 = vmatprep.subr.bf16.mxu0 0
    %206 = vmatpush2.bf16.msra.mxu0 0
    %207 = vmatprep.subr.bf16.mxu0 0
    %208 = vmatpush2.bf16.msra.mxu0 0
    %209 = vmatprep.subr.bf16.mxu0 0
    %210 = vmatpush2.bf16.msra.mxu0 0
    %211 = vmatprep.subr.bf16.mxu0 0
    %212 = vmatpush2.bf16.msra.mxu0 0
    %213 = vmatprep.subr.bf16.mxu0 0
    %214 = vmatpush2.bf16.msra.mxu0 0
    %215 = vmatprep.subr.bf16.mxu0 0
    %216 = vmatpush2.bf16.msra.mxu0 0
    %217 = vmatprep.subr.bf16.mxu0 0
    %218 = vmatpush2.bf16.msra.mxu0 0
    %219 = vmatprep.subr.bf16.mxu0 0
    %220 = vmatpush2.bf16.msra.mxu0 0
    %221 = vmatprep.mubr.bf16.mxu0 0
    %222 = vmatmul.mubr.bf16.gmra.mxu0 %v80
    %v223 = vpop.f32.mrf.mxu0
    %v224 = vadd.f32 %v102, %v223
    %v225 = vpop.f32.mrf.mxu0
    %v226 = vadd.f32 %v106, %v225
    %v227 = vpop.f32.mrf.mxu0
    %v228 = vpop.f32.mrf.mxu0
    %229 = vdwg.mxu0
    %v230 = vmul.f32 %v224, 0.5
    %v231 = vmul.f32 %v226, 0.5
    %v232 = vrcp.pop 1.4142135
    %v233 = vmul.f32 %v224, %v232
    %v234 = vmul.f32 %v226, %v232
    %v235 = verf.f32.pop %v233
    %v236 = verf.f32.pop %v234
    %v237 = vadd.f32 %v235, 1.0
    %v238 = vadd.f32 %v236, 1.0
    %v239 = vmul.f32 %v230, %v237
    %v240 = vmul.f32 %v231, %v238
    %v241 = vpack.c.bf16 %v239, %v239
    %v242 = vpack.c.bf16 %v240, %v240
    %v243 = vld [vmem:[#allocation7] sm:$0xff]
    %v244 = vld [vmem:[#allocation7 + $0x8] sm:$0xff]
    %v245 = vld [vmem:[#allocation7 + $0x10] sm:$0xff]
    %v246 = vld [vmem:[#allocation7 + $0x18] sm:$0xff]
    %v247 = vld [vmem:[#allocation7 + $0x20] sm:$0xff]
    %v248 = vld [vmem:[#allocation7 + $0x28] sm:$0xff]
    %v249 = vld [vmem:[#allocation7 + $0x30] sm:$0xff]
    %v250 = vld [vmem:[#allocation7 + $0x38] sm:$0xff]
    %v251 = vld [vmem:[#allocation7 + $0x40] sm:$0xff]
    %v252 = vld [vmem:[#allocation7 + $0x48] sm:$0xff]
    %v253 = vld [vmem:[#allocation7 + $0x50] sm:$0xff]
    %v254 = vld [vmem:[#allocation7 + $0x58] sm:$0xff]
    %v255 = vld [vmem:[#allocation7 + $0x60] sm:$0xff]
    %v256 = vld [vmem:[#allocation7 + $0x68] sm:$0xff]
    %v257 = vld [vmem:[#allocation7 + $0x70] sm:$0xff]
    %v258 = vld [vmem:[#allocation7 + $0x78] sm:$0xff]
    %v259 = vld [vmem:[#allocation7 + $0x80] sm:$0xff]
    %v260 = vld [vmem:[#allocation7 + $0x88] sm:$0xff]
    %v261 = vld [vmem:[#allocation7 + $0x90] sm:$0xff]
    %v262 = vld [vmem:[#allocation7 + $0x98] sm:$0xff]
    %v263 = vld [vmem:[#allocation7 + $0xa0] sm:$0xff]
    %v264 = vld [vmem:[#allocation7 + $0xa8] sm:$0xff]
    %v265 = vld [vmem:[#allocation7 + $0xb0] sm:$0xff]
    %v266 = vld [vmem:[#allocation7 + $0xb8] sm:$0xff]
    %v267 = vld [vmem:[#allocation7 + $0xc0] sm:$0xff]
    %v268 = vld [vmem:[#allocation7 + $0xc8] sm:$0xff]
    %v269 = vld [vmem:[#allocation7 + $0xd0] sm:$0xff]
    %v270 = vld [vmem:[#allocation7 + $0xd8] sm:$0xff]
    %v271 = vld [vmem:[#allocation7 + $0xe0] sm:$0xff]
    %v272 = vld [vmem:[#allocation7 + $0xe8] sm:$0xff]
    %v273 = vld [vmem:[#allocation7 + $0xf0] sm:$0xff]
    %v274 = vld [vmem:[#allocation7 + $0xf8] sm:$0xff]
    %v275 = vld [vmem:[#allocation7 + $0x100] sm:$0xff]
    %v276 = vld [vmem:[#allocation7 + $0x108] sm:$0xff]
    %v277 = vld [vmem:[#allocation7 + $0x110] sm:$0xff]
    %v278 = vld [vmem:[#allocation7 + $0x118] sm:$0xff]
    %v279 = vld [vmem:[#allocation7 + $0x120] sm:$0xff]
    %v280 = vld [vmem:[#allocation7 + $0x128] sm:$0xff]
    %v281 = vld [vmem:[#allocation7 + $0x130] sm:$0xff]
    %v282 = vld [vmem:[#allocation7 + $0x138] sm:$0xff]
    %v283 = vld [vmem:[#allocation7 + $0x140] sm:$0xff]
    %v284 = vld [vmem:[#allocation7 + $0x148] sm:$0xff]
    %v285 = vld [vmem:[#allocation7 + $0x150] sm:$0xff]
    %v286 = vld [vmem:[#allocation7 + $0x158] sm:$0xff]
    %v287 = vld [vmem:[#allocation7 + $0x160] sm:$0xff]
    %v288 = vld [vmem:[#allocation7 + $0x168] sm:$0xff]
    %v289 = vld [vmem:[#allocation7 + $0x170] sm:$0xff]
    %v290 = vld [vmem:[#allocation7 + $0x178] sm:$0xff]
    %v291 = vld [vmem:[#allocation7 + $0x180] sm:$0xff]
    %v292 = vld [vmem:[#allocation7 + $0x188] sm:$0xff]
    %v293 = vld [vmem:[#allocation7 + $0x190] sm:$0xff]
    %v294 = vld [vmem:[#allocation7 + $0x198] sm:$0xff]
    %v295 = vld [vmem:[#allocation7 + $0x1a0] sm:$0xff]
    %v296 = vld [vmem:[#allocation7 + $0x1a8] sm:$0xff]
    %v297 = vld [vmem:[#allocation7 + $0x1b0] sm:$0xff]
    %v298 = vld [vmem:[#allocation7 + $0x1b8] sm:$0xff]
    %v299 = vld [vmem:[#allocation7 + $0x1c0] sm:$0xff]
    %v300 = vld [vmem:[#allocation7 + $0x1c8] sm:$0xff]
    %v301 = vld [vmem:[#allocation7 + $0x1d0] sm:$0xff]
    %v302 = vld [vmem:[#allocation7 + $0x1d8] sm:$0xff]
    %v303 = vld [vmem:[#allocation7 + $0x1e0] sm:$0xff]
    %v304 = vld [vmem:[#allocation7 + $0x1e8] sm:$0xff]
    %v305 = vld [vmem:[#allocation7 + $0x1f0] sm:$0xff]
    %v306 = vld [vmem:[#allocation7 + $0x1f8] sm:$0xff]
    %v307 = vld [vmem:[#allocation7 + $0x200] sm:$0xff]
    %v308 = vld [vmem:[#allocation7 + $0x208] sm:$0xff]
    %v309 = vld [vmem:[#allocation7 + $0x210] sm:$0xff]
    %v310 = vld [vmem:[#allocation7 + $0x218] sm:$0xff]
    %v311 = vld [vmem:[#allocation7 + $0x220] sm:$0xff]
    %v312 = vld [vmem:[#allocation7 + $0x228] sm:$0xff]
    %v313 = vld [vmem:[#allocation7 + $0x230] sm:$0xff]
    %v314 = vld [vmem:[#allocation7 + $0x238] sm:$0xff]
    %v315 = vld [vmem:[#allocation7 + $0x240] sm:$0xff]
    %v316 = vld [vmem:[#allocation7 + $0x248] sm:$0xff]
    %v317 = vld [vmem:[#allocation7 + $0x250] sm:$0xff]
    %v318 = vld [vmem:[#allocation7 + $0x258] sm:$0xff]
    %v319 = vld [vmem:[#allocation7 + $0x260] sm:$0xff]
    %v320 = vld [vmem:[#allocation7 + $0x268] sm:$0xff]
    %v321 = vld [vmem:[#allocation7 + $0x270] sm:$0xff]
    %v322 = vld [vmem:[#allocation7 + $0x278] sm:$0xff]
    %v323 = vld [vmem:[#allocation7 + $0x280] sm:$0xff]
    %v324 = vld [vmem:[#allocation7 + $0x288] sm:$0xff]
    %v325 = vld [vmem:[#allocation7 + $0x290] sm:$0xff]
    %v326 = vld [vmem:[#allocation7 + $0x298] sm:$0xff]
    %v327 = vld [vmem:[#allocation7 + $0x2a0] sm:$0xff]
    %v328 = vld [vmem:[#allocation7 + $0x2a8] sm:$0xff]
    %v329 = vld [vmem:[#allocation7 + $0x2b0] sm:$0xff]
    %v330 = vld [vmem:[#allocation7 + $0x2b8] sm:$0xff]
    %v331 = vld [vmem:[#allocation7 + $0x2c0] sm:$0xff]
    %v332 = vld [vmem:[#allocation7 + $0x2c8] sm:$0xff]
    %v333 = vld [vmem:[#allocation7 + $0x2d0] sm:$0xff]
    %v334 = vld [vmem:[#allocation7 + $0x2d8] sm:$0xff]
    %v335 = vld [vmem:[#allocation7 + $0x2e0] sm:$0xff]
    %v336 = vld [vmem:[#allocation7 + $0x2e8] sm:$0xff]
    %v337 = vld [vmem:[#allocation7 + $0x2f0] sm:$0xff]
    %v338 = vld [vmem:[#allocation7 + $0x2f8] sm:$0xff]
    %v339 = vld [vmem:[#allocation7 + $0x300] sm:$0xff]
    %v340 = vld [vmem:[#allocation7 + $0x308] sm:$0xff]
    %v341 = vld [vmem:[#allocation7 + $0x310] sm:$0xff]
    %v342 = vld [vmem:[#allocation7 + $0x318] sm:$0xff]
    %v343 = vld [vmem:[#allocation7 + $0x320] sm:$0xff]
    %v344 = vld [vmem:[#allocation7 + $0x328] sm:$0xff]
    %v345 = vld [vmem:[#allocation7 + $0x330] sm:$0xff]
    %v346 = vld [vmem:[#allocation7 + $0x338] sm:$0xff]
    %v347 = vld [vmem:[#allocation7 + $0x340] sm:$0xff]
    %v348 = vld [vmem:[#allocation7 + $0x348] sm:$0xff]
    %v349 = vld [vmem:[#allocation7 + $0x350] sm:$0xff]
    %v350 = vld [vmem:[#allocation7 + $0x358] sm:$0xff]
    %v351 = vld [vmem:[#allocation7 + $0x360] sm:$0xff]
    %v352 = vld [vmem:[#allocation7 + $0x368] sm:$0xff]
    %v353 = vld [vmem:[#allocation7 + $0x370] sm:$0xff]
    %v354 = vld [vmem:[#allocation7 + $0x378] sm:$0xff]
    %v355 = vld [vmem:[#allocation7 + $0x380] sm:$0xff]
    %v356 = vld [vmem:[#allocation7 + $0x388] sm:$0xff]
    %v357 = vld [vmem:[#allocation7 + $0x390] sm:$0xff]
    %v358 = vld [vmem:[#allocation7 + $0x398] sm:$0xff]
    %v359 = vld [vmem:[#allocation7 + $0x3a0] sm:$0xff]
    %v360 = vld [vmem:[#allocation7 + $0x3a8] sm:$0xff]
    %v361 = vld [vmem:[#allocation7 + $0x3b0] sm:$0xff]
    %v362 = vld [vmem:[#allocation7 + $0x3b8] sm:$0xff]
    %v363 = vld [vmem:[#allocation7 + $0x3c0] sm:$0xff]
    %v364 = vld [vmem:[#allocation7 + $0x3c8] sm:$0xff]
    %v365 = vld [vmem:[#allocation7 + $0x3d0] sm:$0xff]
    %v366 = vld [vmem:[#allocation7 + $0x3d8] sm:$0xff]
    %v367 = vld [vmem:[#allocation7 + $0x3e0] sm:$0xff]
    %v368 = vld [vmem:[#allocation7 + $0x3e8] sm:$0xff]
    %v369 = vld [vmem:[#allocation7 + $0x3f0] sm:$0xff]
    %v370 = vld [vmem:[#allocation7 + $0x3f8] sm:$0xff]
    %v371 = vld [vmem:[#allocation8] sm:$0xff]
    %v373 = vlaneseq
    %v374 = vshrl.u32 %v373, 7
    %v375 = vsub.s32 0, %v374
    %v376 = vrot.slane %v371, %v375
    %v377 = vlaneseq
    %v378 = vshrl.u32 %v377, 7
    %v379 = vsub.s32 1, %v378
    %v380 = vrot.slane %v371, %v379
    %v381 = vlaneseq
    %v382 = vshrl.u32 %v381, 7
    %v383 = vsub.s32 2, %v382
    %v384 = vrot.slane %v371, %v383
    %v385 = vlaneseq
    %v386 = vshrl.u32 %v385, 7
    %v387 = vsub.s32 3, %v386
    %v388 = vrot.slane %v371, %v387
    %v389 = vlaneseq
    %v390 = vshrl.u32 %v389, 7
    %v391 = vsub.s32 4, %v390
    %v392 = vrot.slane %v371, %v391
    %v393 = vlaneseq
    %v394 = vshrl.u32 %v393, 7
    %v395 = vsub.s32 5, %v394
    %v396 = vrot.slane %v371, %v395
    %v397 = vlaneseq
    %v398 = vshrl.u32 %v397, 7
    %v399 = vsub.s32 6, %v398
    %v400 = vrot.slane %v371, %v399
    %v401 = vlaneseq
    %v402 = vshrl.u32 %v401, 7
    %v403 = vsub.s32 7, %v402
    %v404 = vrot.slane %v371, %v403
    %v541 = vunpack.c.l.b16 %v243
    %v542 = vunpack.c.h.b16 %v243
    %v543 = vunpack.c.l.b16 %v244
    %v544 = vunpack.c.h.b16 %v244
    %v545 = vunpack.c.l.b16 %v245
    %v546 = vunpack.c.h.b16 %v245
    %v547 = vunpack.c.l.b16 %v246
    %v548 = vunpack.c.h.b16 %v246
    %v549 = vunpack.c.l.b16 %v247
    %v550 = vunpack.c.h.b16 %v247
    %v551 = vunpack.c.l.b16 %v248
    %v552 = vunpack.c.h.b16 %v248
    %v553 = vunpack.c.l.b16 %v249
    %v554 = vunpack.c.h.b16 %v249
    %v555 = vunpack.c.l.b16 %v250
    %v556 = vunpack.c.h.b16 %v250
    %v557 = vunpack.c.l.b16 %v251
    %v558 = vunpack.c.h.b16 %v251
    %v559 = vunpack.c.l.b16 %v252
    %v560 = vunpack.c.h.b16 %v252
    %v561 = vunpack.c.l.b16 %v253
    %v562 = vunpack.c.h.b16 %v253
    %v563 = vunpack.c.l.b16 %v254
    %v564 = vunpack.c.h.b16 %v254
    %v565 = vunpack.c.l.b16 %v255
    %v566 = vunpack.c.h.b16 %v255
    %v567 = vunpack.c.l.b16 %v256
    %v568 = vunpack.c.h.b16 %v256
    %v569 = vunpack.c.l.b16 %v257
    %v570 = vunpack.c.h.b16 %v257
    %v571 = vunpack.c.l.b16 %v258
    %v572 = vunpack.c.h.b16 %v258
    %v573 = vunpack.c.l.b16 %v259
    %v574 = vunpack.c.h.b16 %v259
    %v575 = vunpack.c.l.b16 %v260
    %v576 = vunpack.c.h.b16 %v260
    %v577 = vunpack.c.l.b16 %v261
    %v578 = vunpack.c.h.b16 %v261
    %v579 = vunpack.c.l.b16 %v262
    %v580 = vunpack.c.h.b16 %v262
    %v581 = vunpack.c.l.b16 %v263
    %v582 = vunpack.c.h.b16 %v263
    %v583 = vunpack.c.l.b16 %v264
    %v584 = vunpack.c.h.b16 %v264
    %v585 = vunpack.c.l.b16 %v265
    %v586 = vunpack.c.h.b16 %v265
    %v587 = vunpack.c.l.b16 %v266
    %v588 = vunpack.c.h.b16 %v266
    %v589 = vunpack.c.l.b16 %v267
    %v590 = vunpack.c.h.b16 %v267
    %v591 = vunpack.c.l.b16 %v268
    %v592 = vunpack.c.h.b16 %v268
    %v593 = vunpack.c.l.b16 %v269
    %v594 = vunpack.c.h.b16 %v269
    %v595 = vunpack.c.l.b16 %v270
    %v596 = vunpack.c.h.b16 %v270
    %v597 = vunpack.c.l.b16 %v271
    %v598 = vunpack.c.h.b16 %v271
    %v599 = vunpack.c.l.b16 %v272
    %v600 = vunpack.c.h.b16 %v272
    %v601 = vunpack.c.l.b16 %v273
    %v602 = vunpack.c.h.b16 %v273
    %v603 = vunpack.c.l.b16 %v274
    %v604 = vunpack.c.h.b16 %v274
    %v605 = vunpack.c.l.b16 %v275
    %v606 = vunpack.c.h.b16 %v275
    %v607 = vunpack.c.l.b16 %v276
    %v608 = vunpack.c.h.b16 %v276
    %v609 = vunpack.c.l.b16 %v277
    %v610 = vunpack.c.h.b16 %v277
    %v611 = vunpack.c.l.b16 %v278
    %v612 = vunpack.c.h.b16 %v278
    %v613 = vunpack.c.l.b16 %v279
    %v614 = vunpack.c.h.b16 %v279
    %v615 = vunpack.c.l.b16 %v280
    %v616 = vunpack.c.h.b16 %v280
    %v617 = vunpack.c.l.b16 %v281
    %v618 = vunpack.c.h.b16 %v281
    %v619 = vunpack.c.l.b16 %v282
    %v620 = vunpack.c.h.b16 %v282
    %v621 = vunpack.c.l.b16 %v283
    %v622 = vunpack.c.h.b16 %v283
    %v623 = vunpack.c.l.b16 %v284
    %v624 = vunpack.c.h.b16 %v284
    %v625 = vunpack.c.l.b16 %v285
    %v626 = vunpack.c.h.b16 %v285
    %v627 = vunpack.c.l.b16 %v286
    %v628 = vunpack.c.h.b16 %v286
    %v629 = vunpack.c.l.b16 %v287
    %v630 = vunpack.c.h.b16 %v287
    %v631 = vunpack.c.l.b16 %v288
    %v632 = vunpack.c.h.b16 %v288
    %v633 = vunpack.c.l.b16 %v289
    %v634 = vunpack.c.h.b16 %v289
    %v635 = vunpack.c.l.b16 %v290
    %v636 = vunpack.c.h.b16 %v290
    %v637 = vunpack.c.l.b16 %v291
    %v638 = vunpack.c.h.b16 %v291
    %v639 = vunpack.c.l.b16 %v292
    %v640 = vunpack.c.h.b16 %v292
    %v641 = vunpack.c.l.b16 %v293
    %v642 = vunpack.c.h.b16 %v293
    %v643 = vunpack.c.l.b16 %v294
    %v644 = vunpack.c.h.b16 %v294
    %v645 = vunpack.c.l.b16 %v295
    %v646 = vunpack.c.h.b16 %v295
    %v647 = vunpack.c.l.b16 %v296
    %v648 = vunpack.c.h.b16 %v296
    %v649 = vunpack.c.l.b16 %v297
    %v650 = vunpack.c.h.b16 %v297
    %v651 = vunpack.c.l.b16 %v298
    %v652 = vunpack.c.h.b16 %v298
    %v653 = vunpack.c.l.b16 %v299
    %v654 = vunpack.c.h.b16 %v299
    %v655 = vunpack.c.l.b16 %v300
    %v656 = vunpack.c.h.b16 %v300
    %v657 = vunpack.c.l.b16 %v301
    %v658 = vunpack.c.h.b16 %v301
    %v659 = vunpack.c.l.b16 %v302
    %v660 = vunpack.c.h.b16 %v302
    %v661 = vunpack.c.l.b16 %v303
    %v662 = vunpack.c.h.b16 %v303
    %v663 = vunpack.c.l.b16 %v304
    %v664 = vunpack.c.h.b16 %v304
    %v665 = vunpack.c.l.b16 %v305
    %v666 = vunpack.c.h.b16 %v305
    %v667 = vunpack.c.l.b16 %v306
    %v668 = vunpack.c.h.b16 %v306
    %v669 = vunpack.c.l.b16 %v307
    %v670 = vunpack.c.h.b16 %v307
    %v671 = vunpack.c.l.b16 %v308
    %v672 = vunpack.c.h.b16 %v308
    %v673 = vunpack.c.l.b16 %v309
    %v674 = vunpack.c.h.b16 %v309
    %v675 = vunpack.c.l.b16 %v310
    %v676 = vunpack.c.h.b16 %v310
    %v677 = vunpack.c.l.b16 %v311
    %v678 = vunpack.c.h.b16 %v311
    %v679 = vunpack.c.l.b16 %v312
    %v680 = vunpack.c.h.b16 %v312
    %v681 = vunpack.c.l.b16 %v313
    %v682 = vunpack.c.h.b16 %v313
    %v683 = vunpack.c.l.b16 %v314
    %v684 = vunpack.c.h.b16 %v314
    %v685 = vunpack.c.l.b16 %v315
    %v686 = vunpack.c.h.b16 %v315
    %v687 = vunpack.c.l.b16 %v316
    %v688 = vunpack.c.h.b16 %v316
    %v689 = vunpack.c.l.b16 %v317
    %v690 = vunpack.c.h.b16 %v317
    %v691 = vunpack.c.l.b16 %v318
    %v692 = vunpack.c.h.b16 %v318
    %v693 = vunpack.c.l.b16 %v319
    %v694 = vunpack.c.h.b16 %v319
    %v695 = vunpack.c.l.b16 %v320
    %v696 = vunpack.c.h.b16 %v320
    %v697 = vunpack.c.l.b16 %v321
    %v698 = vunpack.c.h.b16 %v321
    %v699 = vunpack.c.l.b16 %v322
    %v700 = vunpack.c.h.b16 %v322
    %v701 = vunpack.c.l.b16 %v323
    %v702 = vunpack.c.h.b16 %v323
    %v703 = vunpack.c.l.b16 %v324
    %v704 = vunpack.c.h.b16 %v324
    %v705 = vunpack.c.l.b16 %v325
    %v706 = vunpack.c.h.b16 %v325
    %v707 = vunpack.c.l.b16 %v326
    %v708 = vunpack.c.h.b16 %v326
    %v709 = vunpack.c.l.b16 %v327
    %v710 = vunpack.c.h.b16 %v327
    %v711 = vunpack.c.l.b16 %v328
    %v712 = vunpack.c.h.b16 %v328
    %v713 = vunpack.c.l.b16 %v329
    %v714 = vunpack.c.h.b16 %v329
    %v715 = vunpack.c.l.b16 %v330
    %v716 = vunpack.c.h.b16 %v330
    %v717 = vunpack.c.l.b16 %v331
    %v718 = vunpack.c.h.b16 %v331
    %v719 = vunpack.c.l.b16 %v332
    %v720 = vunpack.c.h.b16 %v332
    %v721 = vunpack.c.l.b16 %v333
    %v722 = vunpack.c.h.b16 %v333
    %v723 = vunpack.c.l.b16 %v334
    %v724 = vunpack.c.h.b16 %v334
    %v725 = vunpack.c.l.b16 %v335
    %v726 = vunpack.c.h.b16 %v335
    %v727 = vunpack.c.l.b16 %v336
    %v728 = vunpack.c.h.b16 %v336
    %v729 = vunpack.c.l.b16 %v337
    %v730 = vunpack.c.h.b16 %v337
    %v731 = vunpack.c.l.b16 %v338
    %v732 = vunpack.c.h.b16 %v338
    %v733 = vunpack.c.l.b16 %v339
    %v734 = vunpack.c.h.b16 %v339
    %v735 = vunpack.c.l.b16 %v340
    %v736 = vunpack.c.h.b16 %v340
    %v737 = vunpack.c.l.b16 %v341
    %v738 = vunpack.c.h.b16 %v341
    %v739 = vunpack.c.l.b16 %v342
    %v740 = vunpack.c.h.b16 %v342
    %v741 = vunpack.c.l.b16 %v343
    %v742 = vunpack.c.h.b16 %v343
    %v743 = vunpack.c.l.b16 %v344
    %v744 = vunpack.c.h.b16 %v344
    %v745 = vunpack.c.l.b16 %v345
    %v746 = vunpack.c.h.b16 %v345
    %v747 = vunpack.c.l.b16 %v346
    %v748 = vunpack.c.h.b16 %v346
    %v749 = vunpack.c.l.b16 %v347
    %v750 = vunpack.c.h.b16 %v347
    %v751 = vunpack.c.l.b16 %v348
    %v752 = vunpack.c.h.b16 %v348
    %v753 = vunpack.c.l.b16 %v349
    %v754 = vunpack.c.h.b16 %v349
    %v755 = vunpack.c.l.b16 %v350
    %v756 = vunpack.c.h.b16 %v350
    %v757 = vunpack.c.l.b16 %v351
    %v758 = vunpack.c.h.b16 %v351
    %v759 = vunpack.c.l.b16 %v352
    %v760 = vunpack.c.h.b16 %v352
    %v761 = vunpack.c.l.b16 %v353
    %v762 = vunpack.c.h.b16 %v353
    %v763 = vunpack.c.l.b16 %v354
    %v764 = vunpack.c.h.b16 %v354
    %v765 = vunpack.c.l.b16 %v355
    %v766 = vunpack.c.h.b16 %v355
    %v767 = vunpack.c.l.b16 %v356
    %v768 = vunpack.c.h.b16 %v356
    %v769 = vunpack.c.l.b16 %v357
    %v770 = vunpack.c.h.b16 %v357
    %v771 = vunpack.c.l.b16 %v358
    %v772 = vunpack.c.h.b16 %v358
    %v773 = vunpack.c.l.b16 %v359
    %v774 = vunpack.c.h.b16 %v359
    %v775 = vunpack.c.l.b16 %v360
    %v776 = vunpack.c.h.b16 %v360
    %v777 = vunpack.c.l.b16 %v361
    %v778 = vunpack.c.h.b16 %v361
    %v779 = vunpack.c.l.b16 %v362
    %v780 = vunpack.c.h.b16 %v362
    %v781 = vunpack.c.l.b16 %v363
    %v782 = vunpack.c.h.b16 %v363
    %v783 = vunpack.c.l.b16 %v364
    %v784 = vunpack.c.h.b16 %v364
    %v785 = vunpack.c.l.b16 %v365
    %v786 = vunpack.c.h.b16 %v365
    %v787 = vunpack.c.l.b16 %v366
    %v788 = vunpack.c.h.b16 %v366
    %v789 = vunpack.c.l.b16 %v367
    %v790 = vunpack.c.h.b16 %v367
    %v791 = vunpack.c.l.b16 %v368
    %v792 = vunpack.c.h.b16 %v368
    %v793 = vunpack.c.l.b16 %v369
    %v794 = vunpack.c.h.b16 %v369
    %v795 = vunpack.c.l.b16 %v370
    %v796 = vunpack.c.h.b16 %v370
    %v797 = vpack.c.b16 %v549, %v541
    %v798 = vpack.c.b16 %v550, %v542
    %v799 = vpack.c.b16 %v551, %v543
    %v800 = vpack.c.b16 %v552, %v544
    %v801 = vpack.c.b16 %v553, %v545
    %v802 = vpack.c.b16 %v554, %v546
    %v803 = vpack.c.b16 %v555, %v547
    %v804 = vpack.c.b16 %v556, %v548
    %v805 = vpack.c.b16 %v565, %v557
    %v806 = vpack.c.b16 %v566, %v558
    %v807 = vpack.c.b16 %v567, %v559
    %v808 = vpack.c.b16 %v568, %v560
    %v809 = vpack.c.b16 %v569, %v561
    %v810 = vpack.c.b16 %v570, %v562
    %v811 = vpack.c.b16 %v571, %v563
    %v812 = vpack.c.b16 %v572, %v564
    %v813 = vpack.c.b16 %v581, %v573
    %v814 = vpack.c.b16 %v582, %v574
    %v815 = vpack.c.b16 %v583, %v575
    %v816 = vpack.c.b16 %v584, %v576
    %v817 = vpack.c.b16 %v585, %v577
    %v818 = vpack.c.b16 %v586, %v578
    %v819 = vpack.c.b16 %v587, %v579
    %v820 = vpack.c.b16 %v588, %v580
    %v821 = vpack.c.b16 %v597, %v589
    %v822 = vpack.c.b16 %v598, %v590
    %v823 = vpack.c.b16 %v599, %v591
    %v824 = vpack.c.b16 %v600, %v592
    %v825 = vpack.c.b16 %v601, %v593
    %v826 = vpack.c.b16 %v602, %v594
    %v827 = vpack.c.b16 %v603, %v595
    %v828 = vpack.c.b16 %v604, %v596
    %v829 = vpack.c.b16 %v613, %v605
    %v830 = vpack.c.b16 %v614, %v606
    %v831 = vpack.c.b16 %v615, %v607
    %v832 = vpack.c.b16 %v616, %v608
    %v833 = vpack.c.b16 %v617, %v609
    %v834 = vpack.c.b16 %v618, %v610
    %v835 = vpack.c.b16 %v619, %v611
    %v836 = vpack.c.b16 %v620, %v612
    %v837 = vpack.c.b16 %v629, %v621
    %v838 = vpack.c.b16 %v630, %v622
    %v839 = vpack.c.b16 %v631, %v623
    %v840 = vpack.c.b16 %v632, %v624
    %v841 = vpack.c.b16 %v633, %v625
    %v842 = vpack.c.b16 %v634, %v626
    %v843 = vpack.c.b16 %v635, %v627
    %v844 = vpack.c.b16 %v636, %v628
    %v845 = vpack.c.b16 %v645, %v637
    %v846 = vpack.c.b16 %v646, %v638
    %v847 = vpack.c.b16 %v647, %v639
    %v848 = vpack.c.b16 %v648, %v640
    %v849 = vpack.c.b16 %v649, %v641
    %v850 = vpack.c.b16 %v650, %v642
    %v851 = vpack.c.b16 %v651, %v643
    %v852 = vpack.c.b16 %v652, %v644
    %v853 = vpack.c.b16 %v661, %v653
    %v854 = vpack.c.b16 %v662, %v654
    %v855 = vpack.c.b16 %v663, %v655
    %v856 = vpack.c.b16 %v664, %v656
    %v857 = vpack.c.b16 %v665, %v657
    %v858 = vpack.c.b16 %v666, %v658
    %v859 = vpack.c.b16 %v667, %v659
    %v860 = vpack.c.b16 %v668, %v660
    %v861 = vpack.c.b16 %v677, %v669
    %v862 = vpack.c.b16 %v678, %v670
    %v863 = vpack.c.b16 %v679, %v671
    %v864 = vpack.c.b16 %v680, %v672
    %v865 = vpack.c.b16 %v681, %v673
    %v866 = vpack.c.b16 %v682, %v674
    %v867 = vpack.c.b16 %v683, %v675
    %v868 = vpack.c.b16 %v684, %v676
    %v869 = vpack.c.b16 %v693, %v685
    %v870 = vpack.c.b16 %v694, %v686
    %v871 = vpack.c.b16 %v695, %v687
    %v872 = vpack.c.b16 %v696, %v688
    %v873 = vpack.c.b16 %v697, %v689
    %v874 = vpack.c.b16 %v698, %v690
    %v875 = vpack.c.b16 %v699, %v691
    %v876 = vpack.c.b16 %v700, %v692
    %v877 = vpack.c.b16 %v709, %v701
    %v878 = vpack.c.b16 %v710, %v702
    %v879 = vpack.c.b16 %v711, %v703
    %v880 = vpack.c.b16 %v712, %v704
    %v881 = vpack.c.b16 %v713, %v705
    %v882 = vpack.c.b16 %v714, %v706
    %v883 = vpack.c.b16 %v715, %v707
    %v884 = vpack.c.b16 %v716, %v708
    %v885 = vpack.c.b16 %v725, %v717
    %v886 = vpack.c.b16 %v726, %v718
    %v887 = vpack.c.b16 %v727, %v719
    %v888 = vpack.c.b16 %v728, %v720
    %v889 = vpack.c.b16 %v729, %v721
    %v890 = vpack.c.b16 %v730, %v722
    %v891 = vpack.c.b16 %v731, %v723
    %v892 = vpack.c.b16 %v732, %v724
    %v893 = vpack.c.b16 %v741, %v733
    %v894 = vpack.c.b16 %v742, %v734
    %v895 = vpack.c.b16 %v743, %v735
    %v896 = vpack.c.b16 %v744, %v736
    %v897 = vpack.c.b16 %v745, %v737
    %v898 = vpack.c.b16 %v746, %v738
    %v899 = vpack.c.b16 %v747, %v739
    %v900 = vpack.c.b16 %v748, %v740
    %v901 = vpack.c.b16 %v757, %v749
    %v902 = vpack.c.b16 %v758, %v750
    %v903 = vpack.c.b16 %v759, %v751
    %v904 = vpack.c.b16 %v760, %v752
    %v905 = vpack.c.b16 %v761, %v753
    %v906 = vpack.c.b16 %v762, %v754
    %v907 = vpack.c.b16 %v763, %v755
    %v908 = vpack.c.b16 %v764, %v756
    %v909 = vpack.c.b16 %v773, %v765
    %v910 = vpack.c.b16 %v774, %v766
    %v911 = vpack.c.b16 %v775, %v767
    %v912 = vpack.c.b16 %v776, %v768
    %v913 = vpack.c.b16 %v777, %v769
    %v914 = vpack.c.b16 %v778, %v770
    %v915 = vpack.c.b16 %v779, %v771
    %v916 = vpack.c.b16 %v780, %v772
    %v917 = vpack.c.b16 %v789, %v781
    %v918 = vpack.c.b16 %v790, %v782
    %v919 = vpack.c.b16 %v791, %v783
    %v920 = vpack.c.b16 %v792, %v784
    %v921 = vpack.c.b16 %v793, %v785
    %v922 = vpack.c.b16 %v794, %v786
    %v923 = vpack.c.b16 %v795, %v787
    %v924 = vpack.c.b16 %v796, %v788
    %1053 = vmatprep.subr.bf16.mxu0 %v854
    %1054 = vmatpush1.bf16.msra.mxu0 %v853
    %1055 = vmatprep.subr.bf16.mxu0 %v846
    %1056 = vmatpush1.bf16.msra.mxu0 %v845
    %1057 = vmatprep.subr.bf16.mxu0 %v838
    %1058 = vmatpush1.bf16.msra.mxu0 %v837
    %1059 = vmatprep.subr.bf16.mxu0 %v830
    %1060 = vmatpush1.bf16.msra.mxu0 %v829
    %1061 = vmatprep.subr.bf16.mxu0 %v822
    %1062 = vmatpush1.bf16.msra.mxu0 %v821
    %1063 = vmatprep.subr.bf16.mxu0 %v814
    %1064 = vmatpush1.bf16.msra.mxu0 %v813
    %1065 = vmatprep.subr.bf16.mxu0 %v806
    %1066 = vmatpush1.bf16.msra.mxu0 %v805
    %1067 = vmatprep.subr.bf16.mxu0 %v798
    %1068 = vmatpush1.bf16.msra.mxu0 %v797
    %1069 = vmatprep.subr.bf16.mxu0 %v918
    %1070 = vmatpush2.bf16.msra.mxu0 %v917
    %1071 = vmatprep.subr.bf16.mxu0 %v910
    %1072 = vmatpush2.bf16.msra.mxu0 %v909
    %1073 = vmatprep.subr.bf16.mxu0 %v902
    %1074 = vmatpush2.bf16.msra.mxu0 %v901
    %1075 = vmatprep.subr.bf16.mxu0 %v894
    %1076 = vmatpush2.bf16.msra.mxu0 %v893
    %1077 = vmatprep.subr.bf16.mxu0 %v886
    %1078 = vmatpush2.bf16.msra.mxu0 %v885
    %1079 = vmatprep.subr.bf16.mxu0 %v878
    %1080 = vmatpush2.bf16.msra.mxu0 %v877
    %1081 = vmatprep.subr.bf16.mxu0 %v870
    %1082 = vmatpush2.bf16.msra.mxu0 %v869
    %1083 = vmatprep.subr.bf16.mxu0 %v862
    %1084 = vmatpush2.bf16.msra.mxu0 %v861
    %1085 = vmatprep.mubr.bf16.mxu0 %v242
    %1086 = vmatmul.mubr.bf16.gmra.mxu0 %v241
    %v1087 = vpop.f32.mrf.mxu0
    %v1088 = vadd.f32 %v376, %v1087
    %v1089 = vpop.f32.mrf.mxu0
    %v1090 = vadd.f32 %v380, %v1089
    %v1091 = vpop.f32.mrf.mxu0
    %v1092 = vpop.f32.mrf.mxu0
    %1093 = vdwg.mxu0
    %1094 = vmatprep.subr.bf16.mxu0 %v856
    %1095 = vmatpush1.bf16.msra.mxu0 %v855
    %1096 = vmatprep.subr.bf16.mxu0 %v848
    %1097 = vmatpush1.bf16.msra.mxu0 %v847
    %1098 = vmatprep.subr.bf16.mxu0 %v840
    %1099 = vmatpush1.bf16.msra.mxu0 %v839
    %1100 = vmatprep.subr.bf16.mxu0 %v832
    %1101 = vmatpush1.bf16.msra.mxu0 %v831
    %1102 = vmatprep.subr.bf16.mxu0 %v824
    %1103 = vmatpush1.bf16.msra.mxu0 %v823
    %1104 = vmatprep.subr.bf16.mxu0 %v816
    %1105 = vmatpush1.bf16.msra.mxu0 %v815
    %1106 = vmatprep.subr.bf16.mxu0 %v808
    %1107 = vmatpush1.bf16.msra.mxu0 %v807
    %1108 = vmatprep.subr.bf16.mxu0 %v800
    %1109 = vmatpush1.bf16.msra.mxu0 %v799
    %1110 = vmatprep.subr.bf16.mxu0 %v920
    %1111 = vmatpush2.bf16.msra.mxu0 %v919
    %1112 = vmatprep.subr.bf16.mxu0 %v912
    %1113 = vmatpush2.bf16.msra.mxu0 %v911
    %1114 = vmatprep.subr.bf16.mxu0 %v904
    %1115 = vmatpush2.bf16.msra.mxu0 %v903
    %1116 = vmatprep.subr.bf16.mxu0 %v896
    %1117 = vmatpush2.bf16.msra.mxu0 %v895
    %1118 = vmatprep.subr.bf16.mxu0 %v888
    %1119 = vmatpush2.bf16.msra.mxu0 %v887
    %1120 = vmatprep.subr.bf16.mxu0 %v880
    %1121 = vmatpush2.bf16.msra.mxu0 %v879
    %1122 = vmatprep.subr.bf16.mxu0 %v872
    %1123 = vmatpush2.bf16.msra.mxu0 %v871
    %1124 = vmatprep.subr.bf16.mxu0 %v864
    %1125 = vmatpush2.bf16.msra.mxu0 %v863
    %1126 = vmatprep.mubr.bf16.mxu0 %v242
    %1127 = vmatmul.mubr.bf16.gmra.mxu0 %v241
    %v1128 = vpop.f32.mrf.mxu0
    %v1129 = vadd.f32 %v384, %v1128
    %v1130 = vpop.f32.mrf.mxu0
    %v1131 = vadd.f32 %v388, %v1130
    %v1132 = vpop.f32.mrf.mxu0
    %v1133 = vpop.f32.mrf.mxu0
    %1134 = vdwg.mxu0
    %1135 = vmatprep.subr.bf16.mxu0 %v858
    %1136 = vmatpush1.bf16.msra.mxu0 %v857
    %1137 = vmatprep.subr.bf16.mxu0 %v850
    %1138 = vmatpush1.bf16.msra.mxu0 %v849
    %1139 = vmatprep.subr.bf16.mxu0 %v842
    %1140 = vmatpush1.bf16.msra.mxu0 %v841
    %1141 = vmatprep.subr.bf16.mxu0 %v834
    %1142 = vmatpush1.bf16.msra.mxu0 %v833
    %1143 = vmatprep.subr.bf16.mxu0 %v826
    %1144 = vmatpush1.bf16.msra.mxu0 %v825
    %1145 = vmatprep.subr.bf16.mxu0 %v818
    %1146 = vmatpush1.bf16.msra.mxu0 %v817
    %1147 = vmatprep.subr.bf16.mxu0 %v810
    %1148 = vmatpush1.bf16.msra.mxu0 %v809
    %1149 = vmatprep.subr.bf16.mxu0 %v802
    %1150 = vmatpush1.bf16.msra.mxu0 %v801
    %1151 = vmatprep.subr.bf16.mxu0 %v922
    %1152 = vmatpush2.bf16.msra.mxu0 %v921
    %1153 = vmatprep.subr.bf16.mxu0 %v914
    %1154 = vmatpush2.bf16.msra.mxu0 %v913
    %1155 = vmatprep.subr.bf16.mxu0 %v906
    %1156 = vmatpush2.bf16.msra.mxu0 %v905
    %1157 = vmatprep.subr.bf16.mxu0 %v898
    %1158 = vmatpush2.bf16.msra.mxu0 %v897
    %1159 = vmatprep.subr.bf16.mxu0 %v890
    %1160 = vmatpush2.bf16.msra.mxu0 %v889
    %1161 = vmatprep.subr.bf16.mxu0 %v882
    %1162 = vmatpush2.bf16.msra.mxu0 %v881
    %1163 = vmatprep.subr.bf16.mxu0 %v874
    %1164 = vmatpush2.bf16.msra.mxu0 %v873
    %1165 = vmatprep.subr.bf16.mxu0 %v866
    %1166 = vmatpush2.bf16.msra.mxu0 %v865
    %1167 = vmatprep.mubr.bf16.mxu0 %v242
    %1168 = vmatmul.mubr.bf16.gmra.mxu0 %v241
    %v1169 = vpop.f32.mrf.mxu0
    %v1170 = vadd.f32 %v392, %v1169
    %v1171 = vpop.f32.mrf.mxu0
    %v1172 = vadd.f32 %v396, %v1171
    %v1173 = vpop.f32.mrf.mxu0
    %v1174 = vpop.f32.mrf.mxu0
    %1175 = vdwg.mxu0
    %1176 = vmatprep.subr.bf16.mxu0 %v860
    %1177 = vmatpush1.bf16.msra.mxu0 %v859
    %1178 = vmatprep.subr.bf16.mxu0 %v852
    %1179 = vmatpush1.bf16.msra.mxu0 %v851
    %1180 = vmatprep.subr.bf16.mxu0 %v844
    %1181 = vmatpush1.bf16.msra.mxu0 %v843
    %1182 = vmatprep.subr.bf16.mxu0 %v836
    %1183 = vmatpush1.bf16.msra.mxu0 %v835
    %1184 = vmatprep.subr.bf16.mxu0 %v828
    %1185 = vmatpush1.bf16.msra.mxu0 %v827
    %1186 = vmatprep.subr.bf16.mxu0 %v820
    %1187 = vmatpush1.bf16.msra.mxu0 %v819
    %1188 = vmatprep.subr.bf16.mxu0 %v812
    %1189 = vmatpush1.bf16.msra.mxu0 %v811
    %1190 = vmatprep.subr.bf16.mxu0 %v804
    %1191 = vmatpush1.bf16.msra.mxu0 %v803
    %1192 = vmatprep.subr.bf16.mxu0 %v924
    %1193 = vmatpush2.bf16.msra.mxu0 %v923
    %1194 = vmatprep.subr.bf16.mxu0 %v916
    %1195 = vmatpush2.bf16.msra.mxu0 %v915
    %1196 = vmatprep.subr.bf16.mxu0 %v908
    %1197 = vmatpush2.bf16.msra.mxu0 %v907
    %1198 = vmatprep.subr.bf16.mxu0 %v900
    %1199 = vmatpush2.bf16.msra.mxu0 %v899
    %1200 = vmatprep.subr.bf16.mxu0 %v892
    %1201 = vmatpush2.bf16.msra.mxu0 %v891
    %1202 = vmatprep.subr.bf16.mxu0 %v884
    %1203 = vmatpush2.bf16.msra.mxu0 %v883
    %1204 = vmatprep.subr.bf16.mxu0 %v876
    %1205 = vmatpush2.bf16.msra.mxu0 %v875
    %1206 = vmatprep.subr.bf16.mxu0 %v868
    %1207 = vmatpush2.bf16.msra.mxu0 %v867
    %1208 = vmatprep.mubr.bf16.mxu0 %v242
    %1209 = vmatmul.mubr.bf16.gmra.mxu0 %v241
    %v1210 = vpop.f32.mrf.mxu0
    %v1211 = vadd.f32 %v400, %v1210
    %v1212 = vpop.f32.mrf.mxu0
    %v1213 = vadd.f32 %v404, %v1212
    %v1214 = vpop.f32.mrf.mxu0
    %v1215 = vpop.f32.mrf.mxu0
    %1216 = vdwg.mxu0
    %v1217 = vld [vmem:[%s5] sm:$0x3]
    %v1218 = vld [vmem:[%s6] sm:$0x3]
    %v1219 = vadd.f32 %v1088, %v1090
    %1220 = vadd.xlane.f32.xlu0 %v1219
    %v1221 = vpop.xlane.xlu0 %1220
    %v1222 = vmul.f32 %v1088, %v1088
    %v1223 = vmul.f32 %v1090, %v1090
    %v1224 = vadd.f32 %v1222, %v1223
    %1225 = vadd.xlane.f32.xlu0 %v1224
    %v1226 = vpop.xlane.xlu0 %1225
    %v1227 = vmul.f32 %v1221, 0.00390625
    %v1228 = vmul.f32 %v1226, 0.00390625
    %v1229 = vmul.f32 %v1227, %v1227
    %v1230 = vsub.f32 %v1228, %v1229
    %v1231 = vsub.f32 %v1088, %v1227
    %v1232 = vsub.f32 %v1090, %v1227
    %v1233 = vadd.f32 %v1230, 1e-05
    %v1234 = vrsqrt.pop %v1233
    %v1235 = vmul.f32 %v1231, %v1234
    %v1236 = vmul.f32 %v1232, %v1234
    %v1238 = vlaneseq
    %v1239 = vshrl.u32 %v1238, 7
    %v1240 = vsub.s32 0, %v1239
    %v1241 = vrot.slane %v1217, %v1240
    %v1242 = vlaneseq
    %v1243 = vshrl.u32 %v1242, 7
    %v1244 = vsub.s32 1, %v1243
    %v1245 = vrot.slane %v1217, %v1244
    %v1248 = vmul.f32 %v1235, %v1241
    %v1249 = vmul.f32 %v1236, %v1245
    %v1251 = vlaneseq
    %v1252 = vshrl.u32 %v1251, 7
    %v1253 = vsub.s32 0, %v1252
    %v1254 = vrot.slane %v1218, %v1253
    %v1255 = vlaneseq
    %v1256 = vshrl.u32 %v1255, 7
    %v1257 = vsub.s32 1, %v1256
    %v1258 = vrot.slane %v1218, %v1257
    %v1261 = vadd.f32 %v1248, %v1254
    %v1262 = vadd.f32 %v1249, %v1258
    %1263 = vst [vmem:[#allocation10] sm:$0xff] %v1261
    %1264 = vst [vmem:[#allocation10 + $0x8] sm:$0xff] %v1262
    %v1265 = vadd.f32 %v1129, %v1131
    %1266 = vadd.xlane.f32.xlu0 %v1265
    %v1267 = vpop.xlane.xlu0 %1266
    %v1268 = vmul.f32 %v1129, %v1129
    %v1269 = vmul.f32 %v1131, %v1131
    %v1270 = vadd.f32 %v1268, %v1269
    %1271 = vadd.xlane.f32.xlu0 %v1270
    %v1272 = vpop.xlane.xlu0 %1271
    %v1273 = vmul.f32 %v1267, 0.00390625
    %v1274 = vmul.f32 %v1272, 0.00390625
    %v1275 = vmul.f32 %v1273, %v1273
    %v1276 = vsub.f32 %v1274, %v1275
    %v1277 = vsub.f32 %v1129, %v1273
    %v1278 = vsub.f32 %v1131, %v1273
    %v1279 = vadd.f32 %v1276, 1e-05
    %v1280 = vrsqrt.pop %v1279
    %v1281 = vmul.f32 %v1277, %v1280
    %v1282 = vmul.f32 %v1278, %v1280
    %v1283 = vmul.f32 %v1281, %v1241
    %v1284 = vmul.f32 %v1282, %v1245
    %v1285 = vadd.f32 %v1283, %v1254
    %v1286 = vadd.f32 %v1284, %v1258
    %1287 = vst [vmem:[#allocation10 + $0x10] sm:$0xff] %v1285
    %1288 = vst [vmem:[#allocation10 + $0x18] sm:$0xff] %v1286
    %v1289 = vadd.f32 %v1170, %v1172
    %1290 = vadd.xlane.f32.xlu0 %v1289
    %v1291 = vpop.xlane.xlu0 %1290
    %v1292 = vmul.f32 %v1170, %v1170
    %v1293 = vmul.f32 %v1172, %v1172
    %v1294 = vadd.f32 %v1292, %v1293
    %1295 = vadd.xlane.f32.xlu0 %v1294
    %v1296 = vpop.xlane.xlu0 %1295
    %v1297 = vmul.f32 %v1291, 0.00390625
    %v1298 = vmul.f32 %v1296, 0.00390625
    %v1299 = vmul.f32 %v1297, %v1297
    %v1300 = vsub.f32 %v1298, %v1299
    %v1301 = vsub.f32 %v1170, %v1297
    %v1302 = vsub.f32 %v1172, %v1297
    %v1303 = vadd.f32 %v1300, 1e-05
    %v1304 = vrsqrt.pop %v1303
    %v1305 = vmul.f32 %v1301, %v1304
    %v1306 = vmul.f32 %v1302, %v1304
    %v1307 = vmul.f32 %v1305, %v1241
    %v1308 = vmul.f32 %v1306, %v1245
    %v1309 = vadd.f32 %v1307, %v1254
    %v1310 = vadd.f32 %v1308, %v1258
    %1311 = vst [vmem:[#allocation10 + $0x20] sm:$0xff] %v1309
    %1312 = vst [vmem:[#allocation10 + $0x28] sm:$0xff] %v1310
    %v1313 = vadd.f32 %v1211, %v1213
    %1314 = vadd.xlane.f32.xlu0 %v1313
    %v1315 = vpop.xlane.xlu0 %1314
    %v1316 = vmul.f32 %v1211, %v1211
    %v1317 = vmul.f32 %v1213, %v1213
    %v1318 = vadd.f32 %v1316, %v1317
    %1319 = vadd.xlane.f32.xlu0 %v1318
    %v1320 = vpop.xlane.xlu0 %1319
    %v1321 = vmul.f32 %v1315, 0.00390625
    %v1322 = vmul.f32 %v1320, 0.00390625
    %v1323 = vmul.f32 %v1321, %v1321
    %v1324 = vsub.f32 %v1322, %v1323
    %v1325 = vsub.f32 %v1211, %v1321
    %v1326 = vsub.f32 %v1213, %v1321
    %v1327 = vadd.f32 %v1324, 1e-05
    %v1328 = vrsqrt.pop %v1327
    %v1329 = vmul.f32 %v1325, %v1328
    %v1330 = vmul.f32 %v1326, %v1328
    %v1331 = vmul.f32 %v1329, %v1241
    %v1332 = vmul.f32 %v1330, %v1245
    %v1333 = vadd.f32 %v1331, %v1254
    %v1334 = vadd.f32 %v1332, %v1258
    %1335 = vst [vmem:[#allocation10 + $0x30] sm:$0xff] %v1333
    %1336 = vst [vmem:[#allocation10 + $0x38] sm:$0xff] %v1334
    // Predicated region
    $region46: #{tpu_custom_call.1} parent=1 // pred_check
      _
    $region47: #{tpu_custom_call.1} parent=1 // pred_check_branch
      %1338 = sbr.rel (0) target = $region49
    $region48: #{tpu_custom_call.1} parent=1 // pred_region
      %s1340 = ssub.s32 1024, 1024
      %1341 = vsyncadd [#allocation4], %s1340
      %s1343 = sshll.u32 [#allocation10], 4
      %s1344 = int_to_ptr.vmem [resolvable:$true] %s1343
      %1346 = dma.vmem_to_hbm [thread:$0]  %s1344, 1024, %s7, [#allocation4]
    $region49: #{tpu_custom_call.1} parent=1 // pred_fallthru
      _
    // Predicated region
    $region50: #{tpu_custom_call.1} parent=1 // pred_check
      _
    $region51: #{tpu_custom_call.1} parent=1 // pred_check_branch
      %1348 = sbr.rel (0) target = $region53
    $region52: #{tpu_custom_call.1} parent=1 // pred_region
      %1349 = dma.done [#allocation4], 1024
    $region53: #{tpu_custom_call.1} parent=1 // pred_fallthru
      _
    %1350 = vsyncpa [#allocation3], 1
    %1351 = vsyncpa [#allocation6], 1
    %1352 = vsyncpa [#allocation9], 1
    %1353 = vsyncpa [#allocation4], 1

</llo_original>
